<compile_context>
chip_gen: v7x
topology: tpu7x:2x2x1
jax: 0.10.0
libtpu: 0.0.40
codegen_flags: <defaults>
</compile_context>

<pallas_src>
import functools

import jax
import jax.numpy as jnp
from jax.experimental import pallas as pl
from jax.experimental.pallas import tpu as pltpu

LANE = 128      # lane width (last-dim alignment)
SUBLANE = 8     # sublane width (second-to-last-dim alignment)


def _round_up(x, m):
    return (x + m - 1) // m * m


def _linear_kernel(x_ref, wt_ref, b_ref, o_ref):
    # x_ref : (TB, F)      f32 flattened images, one batch tile
    # wt_ref: (F, C_pad)   bf16 transposed weight, resident across all steps
    # b_ref : (1, C_pad)   f32 zero-padded bias
    # o_ref : (TB, C_pad)  f32 logits (padded classes -> lane-dense stores)
    x_bf16 = x_ref[...].astype(jnp.bfloat16)           # cast in VMEM, not in HBM
    acc = jnp.dot(x_bf16, wt_ref[...], preferred_element_type=jnp.float32)
    o_ref[...] = acc + b_ref[...]


def prepare_params(weight, bias):
    """One-time parameter prep (hoisted out of the forward hot path).

    weight: (num_classes, in_features) f32 -> (in_features, C_pad) bf16, transposed
    bias  : (num_classes,)             f32 -> (1, C_pad) f32, zero-padded
    """
    num_classes, in_features = weight.shape
    c_pad = _round_up(num_classes, LANE)

    wt = jnp.zeros((in_features, c_pad), jnp.bfloat16)
    wt = wt.at[:, :num_classes].set(weight.T.astype(jnp.bfloat16))

    b2d = jnp.zeros((1, c_pad), jnp.float32)
    b2d = b2d.at[0, :num_classes].set(bias.astype(jnp.float32))
    return wt, b2d


@functools.partial(jax.jit, static_argnames=("num_classes", "batch_tile"))
def logistic_regression_forward(xb, wt_padded, bias_padded, *, num_classes,
                                batch_tile=2048):
    """xb: (N, C, 28, 28) f32; wt_padded: (F, C_pad) bf16; bias_padded: (1, C_pad) f32.

    Returns f32 logits of shape (N, num_classes), matching nn.Linear semantics.
    """
    batch = xb.shape[0]
    in_features, c_pad = wt_padded.shape

    # Free reshape of the contiguous NCHW input -> (N, 784); stays f32 so the
    # kernel is the only consumer of x's HBM bytes.
    x2d = xb.reshape(batch, -1)
    assert x2d.shape[1] == in_features, "flattened features must match weight"

    # Pad batch only to a sublane multiple (8); partial last tiles are allowed.
    b_pad = _round_up(batch, SUBLANE)
    if b_pad != batch:
        x2d = jnp.pad(x2d, ((0, b_pad - batch), (0, 0)))

    # Tile selection: big tiles amortize per-step overhead, but keep >= 2 grid
    # steps when possible so v7x can shard the parallel axis over both TCs.
    if b_pad <= 2 * batch_tile:
        tb = min(batch_tile, _round_up(pl.cdiv(b_pad, 2), SUBLANE))
    else:
        tb = batch_tile
    tb = _round_up(max(tb, SUBLANE), SUBLANE)
    grid = (pl.cdiv(b_pad, tb),)

    # Scoped VMEM sized for the actual double-buffered tiles (+ headroom),
    # capped well under every chip's physical VMEM (v7x: 64 MiB / TC).
    vmem_bytes = (2 * tb * in_features * 4                    # x tiles, f32, 2-buf
                  + 2 * tb * c_pad * 4                        # out tiles, f32, 2-buf
                  + 2 * (in_features * c_pad * 2 + c_pad * 4))  # W^T + bias buffers
    vmem_limit = int(min(vmem_bytes + (8 << 20), 60 << 20))

    cost = pl.CostEstimate(
        flops=2 * b_pad * in_features * c_pad,
        transcendentals=0,
        bytes_accessed=(b_pad * in_features * 4       # x read (f32)
                        + in_features * c_pad * 2     # W^T read (bf16)
                        + c_pad * 4                   # bias read
                        + b_pad * c_pad * 4),         # logits write (f32)
    )

    out = pl.pallas_call(
        _linear_kernel,
        out_shape=jax.ShapeDtypeStruct((b_pad, c_pad), jnp.float32),
        grid=grid,
        in_specs=[
            pl.BlockSpec((tb, in_features), lambda i: (i, 0)),     # batch tile of x
            pl.BlockSpec((in_features, c_pad), lambda i: (0, 0)),  # whole W^T, resident
            pl.BlockSpec((1, c_pad), lambda i: (0, 0)),            # bias, resident
        ],
        out_specs=pl.BlockSpec((tb, c_pad), lambda i: (i, 0)),
        compiler_params=pltpu.CompilerParams(
            dimension_semantics=("parallel",),   # batch tiles independent
            vmem_limit_bytes=vmem_limit,
        ),
        cost_estimate=cost,
    )(x2d, wt_padded, bias_padded)

    # Drop batch + class padding.
    return out[:batch, :num_classes]


def init_params(in_channels, num_classes, key):
    # Deterministic init mimicking nn.Linear's uniform(-1/sqrt(fan_in), 1/sqrt(fan_in)).
    in_features = in_channels * 28 * 28
    k_w, k_b = jax.random.split(key)
    bound = 1.0 / jnp.sqrt(jnp.float32(in_features))
    weight = jax.random.uniform(
        k_w, (num_classes, in_features), jnp.float32, -bound, bound
    )
    bias = jax.random.uniform(
        k_b, (num_classes,), jnp.float32, -bound, bound
    )
    return weight, bias


if __name__ == "__main__":
    key = jax.random.PRNGKey(0)
    k_x, k_p = jax.random.split(key)

    in_channels = 1
    num_classes = 10
    batch = 8

    xb = jax.random.normal(k_x, (batch, in_channels, 28, 28), jnp.float32)
    weight, bias = init_params(in_channels, num_classes, k_p)

    # One-time parameter prep (transpose + class-pad + bf16 cast), outside hot path.
    wt_padded, bias_padded = prepare_params(weight, bias)

    out = logistic_regression_forward(
        xb, wt_padded, bias_padded, num_classes=num_classes
    )
    out = jax.block_until_ready(out)

    # Sanity check against plain-JAX f32 reference (bf16 matmul inputs -> loose tol).
    ref = xb.reshape(batch, -1) @ weight.T + bias
    assert out.shape == (batch, num_classes)
    assert jnp.allclose(out, ref, atol=3e-2, rtol=3e-2)

    # TODO(synk): training_step / validation_step (cross-entropy, accuracy) are
    # host-side training utilities, not part of the forward pass; not kernelized.
    print("KERNEL_OK")
</pallas_src>

<mosaic_0001>
module attributes {stable_mosaic.version = 11 : i64} {
  func.func @_linear_kernel(%arg0: i32, %arg1: memref<8x784xf32, #tpu.memory_space<vmem>>, %arg2: memref<784x128xbf16, #tpu.memory_space<vmem>>, %arg3: memref<1x128xf32, #tpu.memory_space<vmem>>, %arg4: memref<8x128xf32, #tpu.memory_space<vmem>>) attributes {dimension_semantics = [#tpu.dimension_semantics<parallel>], iteration_bounds = array<i64: 1>, scalar_prefetch = 0 : i64, scratch_operands = 0 : i64, tpu.core_type = #tpu.core_type<tc>, window_params = [{transform_indices = @transform_0, window_bounds = array<i64: 8, 784>}, {pipeline_mode = #tpu.pipeline_mode<synchronous>, transform_indices = @transform_1, window_bounds = array<i64: 784, 128>}, {pipeline_mode = #tpu.pipeline_mode<synchronous>, transform_indices = @transform_2, window_bounds = array<i64: 1, 128>}, {transform_indices = @transform_3, window_bounds = array<i64: 8, 128>}]} {
    %c0 = arith.constant 0 : index
    %c0_0 = arith.constant 0 : index
    %0 = vector.load %arg1[%c0, %c0_0] : memref<8x784xf32, #tpu.memory_space<vmem>>, vector<8x784xf32>
    %1 = arith.truncf %0 : vector<8x784xf32> to vector<8x784xbf16>
    %c0_1 = arith.constant 0 : index
    %c0_2 = arith.constant 0 : index
    %2 = vector.load %arg2[%c0_1, %c0_2] : memref<784x128xbf16, #tpu.memory_space<vmem>>, vector<784x128xbf16>
    %cst = arith.constant dense<0.000000e+00> : vector<8x128xf32>
    %3 = tpu.matmul %1, %2, %cst {dimension_numbers = #tpu.dot_dimension_numbers<[1], [0], [0], [1], [0, 0, 1, 1], [], []>} : vector<8x784xbf16>, vector<784x128xbf16>, vector<8x128xf32> -> vector<8x128xf32>
    %c0_3 = arith.constant 0 : index
    %c0_4 = arith.constant 0 : index
    %4 = vector.load %arg3[%c0_3, %c0_4] : memref<1x128xf32, #tpu.memory_space<vmem>>, vector<1x128xf32>
    %5 = vector.broadcast %4 : vector<1x128xf32> to vector<8x128xf32>
    %6 = arith.addf %3, %5 : vector<8x128xf32>
    %c0_5 = arith.constant 0 : index
    %c0_6 = arith.constant 0 : index
    %7 = vector.load %arg4[%c0_5, %c0_6] : memref<8x128xf32, #tpu.memory_space<vmem>>, vector<8x128xf32>
    tpu.vector_store %arg4[%c0_5, %c0_6], %6 {strides = array<i32>} : memref<8x128xf32, #tpu.memory_space<vmem>>, vector<8x128xf32>,
    return
  }
  func.func @transform_0(%arg0: i32) -> (i32, i32) {
    %c0_i32 = arith.constant 0 : i32
    %c0_i32_0 = arith.constant 0 : i32
    return %arg0, %c0_i32 : i32, i32
  }
  func.func @transform_1(%arg0: i32) -> (i32, i32) {
    %c0_i32 = arith.constant 0 : i32
    %c0_i32_0 = arith.constant 0 : i32
    %c0_i32_1 = arith.constant 0 : i32
    return %c0_i32, %c0_i32_0 : i32, i32
  }
  func.func @transform_2(%arg0: i32) -> (i32, i32) {
    %c0_i32 = arith.constant 0 : i32
    %c0_i32_0 = arith.constant 0 : i32
    %c0_i32_1 = arith.constant 0 : i32
    return %c0_i32, %c0_i32_0 : i32, i32
  }
  func.func @transform_3(%arg0: i32) -> (i32, i32) {
    %c0_i32 = arith.constant 0 : i32
    %c0_i32_0 = arith.constant 0 : i32
    return %arg0, %c0_i32 : i32, i32
  }
}

</mosaic_0001>

<llo_original>
// kernel: logistic_regression_forward.1
$region0: #{logistic_regression_forward.1}
  #allocation0 [shape = 'u32[]', space=smem, size = 0x4, offset = 0x4, fixed_abs, tag = 'smem constant byte address 0x4 - core index']
  #allocation1 [shape = 'u32[144,128]{1,0:T(1,128)}', space=vmem, size = 0x12000, scoped, tag = 'internal scratch']
  %s0 = inlined_call_operand.vmem [shape: f32[8,784], index: 0, kind: input, shape index: {}]
  %s1 = inlined_call_operand.vmem [shape: bf16[784,128], index: 1, kind: input, shape index: {}]
  %s2 = inlined_call_operand.vmem [shape: f32[1,128], index: 2, kind: input, shape index: {}]
  %s3 = inlined_call_operand.hbm [shape: f32[8,128], index: 3, kind: output, shape index: {}]
  %s4 = sld [smem:[#allocation0]]
  $region22: #{logistic_regression_forward.1} parent=0
    _
  %s6 = ssub.s32 1, %s4
  %s7 = scalar_select 0, %s6, %s4
  $region1: #{logistic_regression_forward.1} parent=0
    #allocation2 [shape = 'u8[4096]{0}', space=vmem, size = 0x1000, scoped, tag = 'output window, operand 0, single buffered']
    #allocation3 [shape = 's32[1]{0}', space=sflag, size = 0x4, scoped, tag = 'scoped memory for logistic_regression_forward.1']
    %8 = vsyncpa [#allocation3], 0
    // Predicated region
    $region2: #{logistic_regression_forward.1} parent=1 // pred_check
      _
    $region3: #{logistic_regression_forward.1} parent=1 // pred_check_branch
      %10 = sbr.rel (0) target = $region5
    $region4: #{logistic_regression_forward.1} parent=1 // pred_region
      _
    $region5: #{logistic_regression_forward.1} parent=1 // pred_fallthru
      _
    // Predicated region
    $region6: #{logistic_regression_forward.1} parent=1 // pred_check
      _
    $region7: #{logistic_regression_forward.1} parent=1 // pred_check_branch
      %12 = sbr.rel (0) target = $region9
    $region8: #{logistic_regression_forward.1} parent=1 // pred_region
      _
    $region9: #{logistic_regression_forward.1} parent=1 // pred_fallthru
      _
    // Predicated region
    $region10: #{logistic_regression_forward.1} parent=1 // pred_check
      _
    $region11: #{logistic_regression_forward.1} parent=1 // pred_check_branch
      %14 = sbr.rel (0) target = $region13
    $region12: #{logistic_regression_forward.1} parent=1 // pred_region
      _
    $region13: #{logistic_regression_forward.1} parent=1 // pred_fallthru
      _
    %v16 = vld [vmem:[%s0] sm:$0xff]
    %v17 = vld [vmem:[%s0 + $0x8] sm:$0xff]
    %v18 = vld [vmem:[%s0 + $0x10] sm:$0xff]
    %v19 = vld [vmem:[%s0 + $0x18] sm:$0xff]
    %v20 = vld [vmem:[%s0 + $0x20] sm:$0xff]
    %v21 = vld [vmem:[%s0 + $0x28] sm:$0xff]
    %v22 = vld [vmem:[%s0 + $0x30] sm:$0xff]
    %v23 = vpack.c.bf16 %v16, %v16
    %v24 = vpack.c.bf16 %v17, %v17
    %v25 = vpack.c.bf16 %v18, %v18
    %v26 = vpack.c.bf16 %v19, %v19
    %v27 = vpack.c.bf16 %v20, %v20
    %v28 = vpack.c.bf16 %v21, %v21
    %v29 = vpack.c.bf16 %v22, %v22
    %v30 = vld [vmem:[%s1] sm:$0xf]
    %v31 = vld [vmem:[%s1 + $0x4] sm:$0xf]
    %v32 = vld [vmem:[%s1 + $0x8] sm:$0xf]
    %v33 = vld [vmem:[%s1 + $0xc] sm:$0xf]
    %v34 = vld [vmem:[%s1 + $0x10] sm:$0xf]
    %v35 = vld [vmem:[%s1 + $0x14] sm:$0xf]
    %v36 = vld [vmem:[%s1 + $0x18] sm:$0xf]
    %v37 = vld [vmem:[%s1 + $0x1c] sm:$0xf]
    %v38 = vld [vmem:[%s1 + $0x20] sm:$0xf]
    %v39 = vld [vmem:[%s1 + $0x24] sm:$0xf]
    %v40 = vld [vmem:[%s1 + $0x28] sm:$0xf]
    %v41 = vld [vmem:[%s1 + $0x2c] sm:$0xf]
    %v42 = vld [vmem:[%s1 + $0x30] sm:$0xf]
    %v43 = vld [vmem:[%s1 + $0x34] sm:$0xf]
    %v44 = vld [vmem:[%s1 + $0x38] sm:$0xf]
    %v45 = vld [vmem:[%s1 + $0x3c] sm:$0xf]
    %v46 = vld [vmem:[%s1 + $0x40] sm:$0xf]
    %v47 = vld [vmem:[%s1 + $0x44] sm:$0xf]
    %v48 = vld [vmem:[%s1 + $0x48] sm:$0xf]
    %v49 = vld [vmem:[%s1 + $0x4c] sm:$0xf]
    %v50 = vld [vmem:[%s1 + $0x50] sm:$0xf]
    %v51 = vld [vmem:[%s1 + $0x54] sm:$0xf]
    %v52 = vld [vmem:[%s1 + $0x58] sm:$0xf]
    %v53 = vld [vmem:[%s1 + $0x5c] sm:$0xf]
    %v54 = vld [vmem:[%s1 + $0x60] sm:$0xf]
    %v55 = vld [vmem:[%s1 + $0x64] sm:$0xf]
    %v56 = vld [vmem:[%s1 + $0x68] sm:$0xf]
    %v57 = vld [vmem:[%s1 + $0x6c] sm:$0xf]
    %v58 = vld [vmem:[%s1 + $0x70] sm:$0xf]
    %v59 = vld [vmem:[%s1 + $0x74] sm:$0xf]
    %v60 = vld [vmem:[%s1 + $0x78] sm:$0xf]
    %v61 = vld [vmem:[%s1 + $0x7c] sm:$0xf]
    %v62 = vld [vmem:[%s1 + $0x80] sm:$0xf]
    %v63 = vld [vmem:[%s1 + $0x84] sm:$0xf]
    %v64 = vld [vmem:[%s1 + $0x88] sm:$0xf]
    %v65 = vld [vmem:[%s1 + $0x8c] sm:$0xf]
    %v66 = vld [vmem:[%s1 + $0x90] sm:$0xf]
    %v67 = vld [vmem:[%s1 + $0x94] sm:$0xf]
    %v68 = vld [vmem:[%s1 + $0x98] sm:$0xf]
    %v69 = vld [vmem:[%s1 + $0x9c] sm:$0xf]
    %v70 = vld [vmem:[%s1 + $0xa0] sm:$0xf]
    %v71 = vld [vmem:[%s1 + $0xa4] sm:$0xf]
    %v72 = vld [vmem:[%s1 + $0xa8] sm:$0xf]
    %v73 = vld [vmem:[%s1 + $0xac] sm:$0xf]
    %v74 = vld [vmem:[%s1 + $0xb0] sm:$0xf]
    %v75 = vld [vmem:[%s1 + $0xb4] sm:$0xf]
    %v76 = vld [vmem:[%s1 + $0xb8] sm:$0xf]
    %v77 = vld [vmem:[%s1 + $0xbc] sm:$0xf]
    %v78 = vld [vmem:[%s1 + $0xc0] sm:$0xf]
    %v79 = vld [vmem:[%s1 + $0xc4] sm:$0xf]
    %v80 = vld [vmem:[%s1 + $0xc8] sm:$0xf]
    %v81 = vld [vmem:[%s1 + $0xcc] sm:$0xf]
    %v82 = vld [vmem:[%s1 + $0xd0] sm:$0xf]
    %v83 = vld [vmem:[%s1 + $0xd4] sm:$0xf]
    %v84 = vld [vmem:[%s1 + $0xd8] sm:$0xf]
    %v85 = vld [vmem:[%s1 + $0xdc] sm:$0xf]
    %v86 = vld [vmem:[%s1 + $0xe0] sm:$0xf]
    %v87 = vld [vmem:[%s1 + $0xe4] sm:$0xf]
    %v88 = vld [vmem:[%s1 + $0xe8] sm:$0xf]
    %v89 = vld [vmem:[%s1 + $0xec] sm:$0xf]
    %v90 = vld [vmem:[%s1 + $0xf0] sm:$0xf]
    %v91 = vld [vmem:[%s1 + $0xf4] sm:$0xf]
    %v92 = vld [vmem:[%s1 + $0xf8] sm:$0xf]
    %v93 = vld [vmem:[%s1 + $0xfc] sm:$0xf]
    %v94 = vld [vmem:[%s1 + $0x100] sm:$0xf]
    %v95 = vld [vmem:[%s1 + $0x104] sm:$0xf]
    %v96 = vld [vmem:[%s1 + $0x108] sm:$0xf]
    %v97 = vld [vmem:[%s1 + $0x10c] sm:$0xf]
    %v98 = vld [vmem:[%s1 + $0x110] sm:$0xf]
    %v99 = vld [vmem:[%s1 + $0x114] sm:$0xf]
    %v100 = vld [vmem:[%s1 + $0x118] sm:$0xf]
    %v101 = vld [vmem:[%s1 + $0x11c] sm:$0xf]
    %v102 = vld [vmem:[%s1 + $0x120] sm:$0xf]
    %v103 = vld [vmem:[%s1 + $0x124] sm:$0xf]
    %v104 = vld [vmem:[%s1 + $0x128] sm:$0xf]
    %v105 = vld [vmem:[%s1 + $0x12c] sm:$0xf]
    %v106 = vld [vmem:[%s1 + $0x130] sm:$0xf]
    %v107 = vld [vmem:[%s1 + $0x134] sm:$0xf]
    %v108 = vld [vmem:[%s1 + $0x138] sm:$0xf]
    %v109 = vld [vmem:[%s1 + $0x13c] sm:$0xf]
    %v110 = vld [vmem:[%s1 + $0x140] sm:$0xf]
    %v111 = vld [vmem:[%s1 + $0x144] sm:$0xf]
    %v112 = vld [vmem:[%s1 + $0x148] sm:$0xf]
    %v113 = vld [vmem:[%s1 + $0x14c] sm:$0xf]
    %v114 = vld [vmem:[%s1 + $0x150] sm:$0xf]
    %v115 = vld [vmem:[%s1 + $0x154] sm:$0xf]
    %v116 = vld [vmem:[%s1 + $0x158] sm:$0xf]
    %v117 = vld [vmem:[%s1 + $0x15c] sm:$0xf]
    %v118 = vld [vmem:[%s1 + $0x160] sm:$0xf]
    %v119 = vld [vmem:[%s1 + $0x164] sm:$0xf]
    %v120 = vld [vmem:[%s1 + $0x168] sm:$0xf]
    %v121 = vld [vmem:[%s1 + $0x16c] sm:$0xf]
    %v122 = vld [vmem:[%s1 + $0x170] sm:$0xf]
    %v123 = vld [vmem:[%s1 + $0x174] sm:$0xf]
    %v124 = vld [vmem:[%s1 + $0x178] sm:$0xf]
    %v125 = vld [vmem:[%s1 + $0x17c] sm:$0xf]
    %v126 = vld [vmem:[%s1 + $0x180] sm:$0xf]
    %v127 = vld [vmem:[%s1 + $0x184] sm:$0xf]
    %v128 = vld [vmem:[%s2] sm:$0x1]
    %v130 = vlaneseq
    %v131 = vshrl.u32 %v130, 7
    %v132 = vsub.s32 0, %v131
    %v133 = vrot.slane %v128, %v132
    %v233 = vunpack.c.l.b16 %v30
    %v234 = vunpack.c.l.b16 %v31
    %v235 = vunpack.c.l.b16 %v32
    %v236 = vunpack.c.l.b16 %v33
    %v237 = vunpack.c.l.b16 %v34
    %v238 = vunpack.c.l.b16 %v35
    %v239 = vunpack.c.l.b16 %v36
    %v240 = vunpack.c.l.b16 %v37
    %v241 = vunpack.c.l.b16 %v38
    %v242 = vunpack.c.l.b16 %v39
    %v243 = vunpack.c.l.b16 %v40
    %v244 = vunpack.c.l.b16 %v41
    %v245 = vunpack.c.l.b16 %v42
    %v246 = vunpack.c.l.b16 %v43
    %v247 = vunpack.c.l.b16 %v44
    %v248 = vunpack.c.l.b16 %v45
    %v249 = vunpack.c.l.b16 %v46
    %v250 = vunpack.c.l.b16 %v47
    %v251 = vunpack.c.l.b16 %v48
    %v252 = vunpack.c.l.b16 %v49
    %v253 = vunpack.c.l.b16 %v50
    %v254 = vunpack.c.l.b16 %v51
    %v255 = vunpack.c.l.b16 %v52
    %v256 = vunpack.c.l.b16 %v53
    %v257 = vunpack.c.l.b16 %v54
    %v258 = vunpack.c.l.b16 %v55
    %v259 = vunpack.c.l.b16 %v56
    %v260 = vunpack.c.l.b16 %v57
    %v261 = vunpack.c.l.b16 %v58
    %v262 = vunpack.c.l.b16 %v59
    %v263 = vunpack.c.l.b16 %v60
    %v264 = vunpack.c.l.b16 %v61
    %v265 = vunpack.c.l.b16 %v62
    %v266 = vunpack.c.l.b16 %v63
    %v267 = vunpack.c.l.b16 %v64
    %v268 = vunpack.c.l.b16 %v65
    %v269 = vunpack.c.l.b16 %v66
    %v270 = vunpack.c.l.b16 %v67
    %v271 = vunpack.c.l.b16 %v68
    %v272 = vunpack.c.l.b16 %v69
    %v273 = vunpack.c.l.b16 %v70
    %v274 = vunpack.c.l.b16 %v71
    %v275 = vunpack.c.l.b16 %v72
    %v276 = vunpack.c.l.b16 %v73
    %v277 = vunpack.c.l.b16 %v74
    %v278 = vunpack.c.l.b16 %v75
    %v279 = vunpack.c.l.b16 %v76
    %v280 = vunpack.c.l.b16 %v77
    %v281 = vunpack.c.l.b16 %v78
    %v282 = vunpack.c.l.b16 %v79
    %v283 = vunpack.c.l.b16 %v80
    %v284 = vunpack.c.l.b16 %v81
    %v285 = vunpack.c.l.b16 %v82
    %v286 = vunpack.c.l.b16 %v83
    %v287 = vunpack.c.l.b16 %v84
    %v288 = vunpack.c.l.b16 %v85
    %v289 = vunpack.c.l.b16 %v86
    %v290 = vunpack.c.l.b16 %v87
    %v291 = vunpack.c.l.b16 %v88
    %v292 = vunpack.c.l.b16 %v89
    %v293 = vunpack.c.l.b16 %v90
    %v294 = vunpack.c.l.b16 %v91
    %v295 = vunpack.c.l.b16 %v92
    %v296 = vunpack.c.l.b16 %v93
    %v297 = vunpack.c.l.b16 %v94
    %v298 = vunpack.c.l.b16 %v95
    %v299 = vunpack.c.l.b16 %v96
    %v300 = vunpack.c.l.b16 %v97
    %v301 = vunpack.c.l.b16 %v98
    %v302 = vunpack.c.l.b16 %v99
    %v303 = vunpack.c.l.b16 %v100
    %v304 = vunpack.c.l.b16 %v101
    %v305 = vunpack.c.l.b16 %v102
    %v306 = vunpack.c.l.b16 %v103
    %v307 = vunpack.c.l.b16 %v104
    %v308 = vunpack.c.l.b16 %v105
    %v309 = vunpack.c.l.b16 %v106
    %v310 = vunpack.c.l.b16 %v107
    %v311 = vunpack.c.l.b16 %v108
    %v312 = vunpack.c.l.b16 %v109
    %v313 = vunpack.c.l.b16 %v110
    %v314 = vunpack.c.l.b16 %v111
    %v315 = vunpack.c.l.b16 %v112
    %v316 = vunpack.c.l.b16 %v113
    %v317 = vunpack.c.l.b16 %v114
    %v318 = vunpack.c.l.b16 %v115
    %v319 = vunpack.c.l.b16 %v116
    %v320 = vunpack.c.l.b16 %v117
    %v321 = vunpack.c.l.b16 %v118
    %v322 = vunpack.c.l.b16 %v119
    %v323 = vunpack.c.l.b16 %v120
    %v324 = vunpack.c.l.b16 %v121
    %v325 = vunpack.c.l.b16 %v122
    %v326 = vunpack.c.l.b16 %v123
    %v327 = vunpack.c.l.b16 %v124
    %v328 = vunpack.c.l.b16 %v125
    %v329 = vunpack.c.l.b16 %v126
    %v330 = vunpack.c.l.b16 %v127
    %v331 = vpack.c.b16 %v234, %v233
    %v332 = vpack.c.b16 %v236, %v235
    %v333 = vpack.c.b16 %v238, %v237
    %v334 = vpack.c.b16 %v240, %v239
    %v335 = vpack.c.b16 %v242, %v241
    %v336 = vpack.c.b16 %v244, %v243
    %v337 = vpack.c.b16 %v246, %v245
    %v338 = vpack.c.b16 %v248, %v247
    %v339 = vpack.c.b16 %v250, %v249
    %v340 = vpack.c.b16 %v252, %v251
    %v341 = vpack.c.b16 %v254, %v253
    %v342 = vpack.c.b16 %v256, %v255
    %v343 = vpack.c.b16 %v258, %v257
    %v344 = vpack.c.b16 %v260, %v259
    %v345 = vpack.c.b16 %v262, %v261
    %v346 = vpack.c.b16 %v264, %v263
    %v347 = vpack.c.b16 %v266, %v265
    %v348 = vpack.c.b16 %v268, %v267
    %v349 = vpack.c.b16 %v270, %v269
    %v350 = vpack.c.b16 %v272, %v271
    %v351 = vpack.c.b16 %v274, %v273
    %v352 = vpack.c.b16 %v276, %v275
    %v353 = vpack.c.b16 %v278, %v277
    %v354 = vpack.c.b16 %v280, %v279
    %v355 = vpack.c.b16 %v282, %v281
    %v356 = vpack.c.b16 %v284, %v283
    %v357 = vpack.c.b16 %v286, %v285
    %v358 = vpack.c.b16 %v288, %v287
    %v359 = vpack.c.b16 %v290, %v289
    %v360 = vpack.c.b16 %v292, %v291
    %v361 = vpack.c.b16 %v294, %v293
    %v362 = vpack.c.b16 %v296, %v295
    %v363 = vpack.c.b16 %v298, %v297
    %v364 = vpack.c.b16 %v300, %v299
    %v365 = vpack.c.b16 %v302, %v301
    %v366 = vpack.c.b16 %v304, %v303
    %v367 = vpack.c.b16 %v306, %v305
    %v368 = vpack.c.b16 %v308, %v307
    %v369 = vpack.c.b16 %v310, %v309
    %v370 = vpack.c.b16 %v312, %v311
    %v371 = vpack.c.b16 %v314, %v313
    %v372 = vpack.c.b16 %v316, %v315
    %v373 = vpack.c.b16 %v318, %v317
    %v374 = vpack.c.b16 %v320, %v319
    %v375 = vpack.c.b16 %v322, %v321
    %v376 = vpack.c.b16 %v324, %v323
    %v377 = vpack.c.b16 %v326, %v325
    %v378 = vpack.c.b16 %v328, %v327
    %v379 = vpack.c.b16 %v330, %v329
    %vm429 = vcmask 130048
    %v431 = vsel %vm429, %v29, 0
    %433 = vmatprep.subr.bf16.mxu0 0
    %434 = vmatpush1.bf16.msra.mxu0 %v331
    %435 = vmatprep.subr.bf16.mxu0 0
    %436 = vmatpush1.bf16.msra.mxu0 %v332
    %437 = vmatprep.subr.bf16.mxu0 0
    %438 = vmatpush1.bf16.msra.mxu0 %v333
    %439 = vmatprep.subr.bf16.mxu0 0
    %440 = vmatpush1.bf16.msra.mxu0 %v334
    %441 = vmatprep.subr.bf16.mxu0 0
    %442 = vmatpush1.bf16.msra.mxu0 %v335
    %443 = vmatprep.subr.bf16.mxu0 0
    %444 = vmatpush1.bf16.msra.mxu0 %v336
    %445 = vmatprep.subr.bf16.mxu0 0
    %446 = vmatpush1.bf16.msra.mxu0 %v337
    %447 = vmatprep.subr.bf16.mxu0 0
    %448 = vmatpush1.bf16.msra.mxu0 %v338
    %449 = vmatprep.subr.bf16.mxu0 0
    %450 = vmatpush1.bf16.msra.mxu0 %v339
    %451 = vmatprep.subr.bf16.mxu0 0
    %452 = vmatpush1.bf16.msra.mxu0 %v340
    %453 = vmatprep.subr.bf16.mxu0 0
    %454 = vmatpush1.bf16.msra.mxu0 %v341
    %455 = vmatprep.subr.bf16.mxu0 0
    %456 = vmatpush1.bf16.msra.mxu0 %v342
    %457 = vmatprep.subr.bf16.mxu0 0
    %458 = vmatpush1.bf16.msra.mxu0 %v343
    %459 = vmatprep.subr.bf16.mxu0 0
    %460 = vmatpush1.bf16.msra.mxu0 %v344
    %461 = vmatprep.subr.bf16.mxu0 0
    %462 = vmatpush1.bf16.msra.mxu0 %v345
    %463 = vmatprep.subr.bf16.mxu0 0
    %464 = vmatpush1.bf16.msra.mxu0 %v346
    %465 = vmatprep.mubr.bf16.mxu0 %v24
    %466 = vmatmul.mubr.bf16.gmra.mrb[0].mxu0 %v23
    %v467 = vpop.f32.mrb[0].mxu0
    %v468 = vadd.f32 %v133, %v467
    %v469 = vpop.f32.mrb[0].mxu0
    %v470 = vpop.f32.mrb[0].mxu0
    %v471 = vpop.f32.mrb[0].mxu0
    %472 = vdwg.mxu0
    %473 = vmatprep.subr.bf16.mxu0 0
    %474 = vmatpush1.bf16.msra.mxu0 %v347
    %475 = vmatprep.subr.bf16.mxu0 0
    %476 = vmatpush1.bf16.msra.mxu0 %v348
    %477 = vmatprep.subr.bf16.mxu0 0
    %478 = vmatpush1.bf16.msra.mxu0 %v349
    %479 = vmatprep.subr.bf16.mxu0 0
    %480 = vmatpush1.bf16.msra.mxu0 %v350
    %481 = vmatprep.subr.bf16.mxu0 0
    %482 = vmatpush1.bf16.msra.mxu0 %v351
    %483 = vmatprep.subr.bf16.mxu0 0
    %484 = vmatpush1.bf16.msra.mxu0 %v352
    %485 = vmatprep.subr.bf16.mxu0 0
    %486 = vmatpush1.bf16.msra.mxu0 %v353
    %487 = vmatprep.subr.bf16.mxu0 0
    %488 = vmatpush1.bf16.msra.mxu0 %v354
    %489 = vmatprep.subr.bf16.mxu0 0
    %490 = vmatpush1.bf16.msra.mxu0 %v355
    %491 = vmatprep.subr.bf16.mxu0 0
    %492 = vmatpush1.bf16.msra.mxu0 %v356
    %493 = vmatprep.subr.bf16.mxu0 0
    %494 = vmatpush1.bf16.msra.mxu0 %v357
    %495 = vmatprep.subr.bf16.mxu0 0
    %496 = vmatpush1.bf16.msra.mxu0 %v358
    %497 = vmatprep.subr.bf16.mxu0 0
    %498 = vmatpush1.bf16.msra.mxu0 %v359
    %499 = vmatprep.subr.bf16.mxu0 0
    %500 = vmatpush1.bf16.msra.mxu0 %v360
    %501 = vmatprep.subr.bf16.mxu0 0
    %502 = vmatpush1.bf16.msra.mxu0 %v361
    %503 = vmatprep.subr.bf16.mxu0 0
    %504 = vmatpush1.bf16.msra.mxu0 %v362
    %505 = vmatprep.mubr.bf16.mxu0 %v26
    %506 = vmatmul.mubr.bf16.gmra.mrb[0].mxu0 %v25
    %v507 = vpop.f32.mrb[0].mxu0
    %v508 = vadd.f32 %v468, %v507
    %v509 = vpop.f32.mrb[0].mxu0
    %v510 = vpop.f32.mrb[0].mxu0
    %v511 = vpop.f32.mrb[0].mxu0
    %512 = vdwg.mxu0
    %513 = vmatprep.subr.bf16.mxu0 0
    %514 = vmatpush1.bf16.msra.mxu0 %v363
    %515 = vmatprep.subr.bf16.mxu0 0
    %516 = vmatpush1.bf16.msra.mxu0 %v364
    %517 = vmatprep.subr.bf16.mxu0 0
    %518 = vmatpush1.bf16.msra.mxu0 %v365
    %519 = vmatprep.subr.bf16.mxu0 0
    %520 = vmatpush1.bf16.msra.mxu0 %v366
    %521 = vmatprep.subr.bf16.mxu0 0
    %522 = vmatpush1.bf16.msra.mxu0 %v367
    %523 = vmatprep.subr.bf16.mxu0 0
    %524 = vmatpush1.bf16.msra.mxu0 %v368
    %525 = vmatprep.subr.bf16.mxu0 0
    %526 = vmatpush1.bf16.msra.mxu0 %v369
    %527 = vmatprep.subr.bf16.mxu0 0
    %528 = vmatpush1.bf16.msra.mxu0 %v370
    %529 = vmatprep.subr.bf16.mxu0 0
    %530 = vmatpush1.bf16.msra.mxu0 %v371
    %531 = vmatprep.subr.bf16.mxu0 0
    %532 = vmatpush1.bf16.msra.mxu0 %v372
    %533 = vmatprep.subr.bf16.mxu0 0
    %534 = vmatpush1.bf16.msra.mxu0 %v373
    %535 = vmatprep.subr.bf16.mxu0 0
    %536 = vmatpush1.bf16.msra.mxu0 %v374
    %537 = vmatprep.subr.bf16.mxu0 0
    %538 = vmatpush1.bf16.msra.mxu0 %v375
    %539 = vmatprep.subr.bf16.mxu0 0
    %540 = vmatpush1.bf16.msra.mxu0 %v376
    %541 = vmatprep.subr.bf16.mxu0 0
    %542 = vmatpush1.bf16.msra.mxu0 %v377
    %543 = vmatprep.subr.bf16.mxu0 0
    %544 = vmatpush1.bf16.msra.mxu0 %v378
    %545 = vmatprep.mubr.bf16.mxu0 %v28
    %546 = vmatmul.mubr.bf16.gmra.mrb[0].mxu0 %v27
    %v547 = vpop.f32.mrb[0].mxu0
    %v548 = vadd.f32 %v508, %v547
    %v549 = vpop.f32.mrb[0].mxu0
    %v550 = vpop.f32.mrb[0].mxu0
    %v551 = vpop.f32.mrb[0].mxu0
    %552 = vdwg.mxu0
    %553 = vmatprep.subr.bf16.mxu0 0
    %554 = vmatpush1.bf16.msra.mxu0 %v379
    %555 = vmatprep.subr.bf16.mxu0 0
    %556 = vmatpush1.bf16.msra.mxu0 0
    %557 = vmatprep.subr.bf16.mxu0 0
    %558 = vmatpush1.bf16.msra.mxu0 0
    %559 = vmatprep.subr.bf16.mxu0 0
    %560 = vmatpush1.bf16.msra.mxu0 0
    %561 = vmatprep.subr.bf16.mxu0 0
    %562 = vmatpush1.bf16.msra.mxu0 0
    %563 = vmatprep.subr.bf16.mxu0 0
    %564 = vmatpush1.bf16.msra.mxu0 0
    %565 = vmatprep.subr.bf16.mxu0 0
    %566 = vmatpush1.bf16.msra.mxu0 0
    %567 = vmatprep.subr.bf16.mxu0 0
    %568 = vmatpush1.bf16.msra.mxu0 0
    %569 = vmatprep.subr.bf16.mxu0 0
    %570 = vmatpush1.bf16.msra.mxu0 0
    %571 = vmatprep.subr.bf16.mxu0 0
    %572 = vmatpush1.bf16.msra.mxu0 0
    %573 = vmatprep.subr.bf16.mxu0 0
    %574 = vmatpush1.bf16.msra.mxu0 0
    %575 = vmatprep.subr.bf16.mxu0 0
    %576 = vmatpush1.bf16.msra.mxu0 0
    %577 = vmatprep.subr.bf16.mxu0 0
    %578 = vmatpush1.bf16.msra.mxu0 0
    %579 = vmatprep.subr.bf16.mxu0 0
    %580 = vmatpush1.bf16.msra.mxu0 0
    %581 = vmatprep.subr.bf16.mxu0 0
    %582 = vmatpush1.bf16.msra.mxu0 0
    %583 = vmatprep.subr.bf16.mxu0 0
    %584 = vmatpush1.bf16.msra.mxu0 0
    %585 = vmatprep.mubr.bf16.mxu0 0
    %586 = vmatmul.mubr.bf16.gmra.mrb[0].mxu0 %v431
    %v587 = vpop.f32.mrb[0].mxu0
    %v588 = vadd.f32 %v548, %v587
    %v589 = vpop.f32.mrb[0].mxu0
    %v590 = vpop.f32.mrb[0].mxu0
    %v591 = vpop.f32.mrb[0].mxu0
    %592 = vdwg.mxu0
    %593 = vst [vmem:[#allocation2] sm:$0xff] %v588
    // Predicated region
    $region14: #{logistic_regression_forward.1} parent=1 // pred_check
      _
    $region15: #{logistic_regression_forward.1} parent=1 // pred_check_branch
      %595 = sbr.rel (0) target = $region17
    $region16: #{logistic_regression_forward.1} parent=1 // pred_region
      %s597 = ssub.s32 128, 128
      %598 = vsyncadd [#allocation3], %s597
      %s600 = sshll.u32 [#allocation2], 4
      %s601 = int_to_ptr.vmem [resolvable:$true] %s600
      %603 = dma.vmem_to_hbm [thread:$0]  %s601, 128, %s3, [#allocation3]
    $region17: #{logistic_regression_forward.1} parent=1 // pred_fallthru
      _
    // Predicated region
    $region18: #{logistic_regression_forward.1} parent=1 // pred_check
      _
    $region19: #{logistic_regression_forward.1} parent=1 // pred_check_branch
      %605 = sbr.rel (0) target = $region21
    $region20: #{logistic_regression_forward.1} parent=1 // pred_region
      %606 = dma.done [#allocation3], 128
    $region21: #{logistic_regression_forward.1} parent=1 // pred_fallthru
      _
    %607 = vsyncpa [#allocation3], 1

</llo_original>
